<compile_context>
chip_gen: v7x
topology: tpu7x:2x2x1
jax: 0.10.0
libtpu: 0.0.40
codegen_flags: <defaults>
</compile_context>

<pallas_src>
import functools

import jax
import jax.numpy as jnp
from jax.experimental import pallas as pl
from jax.experimental.pallas import tpu as pltpu


def add_layernorm_kernel(a_ref, b_ref, gamma_ref, beta_ref, out_ref, *, eps, inv_c):
    # x = a + b in f32 (kernel is HBM/launch bound, so the upcast is free).
    x = a_ref[...].astype(jnp.float32) + b_ref[...].astype(jnp.float32)

    # Two-pass centered statistics: numerically robust even when |mean| >> std
    # (post-residual activations).  Both reductions are XLU; the broadcast
    # subtract in between is VPU filler under the HBM-bound roofline.
    mean = jnp.sum(x, axis=-1, keepdims=True) * inv_c
    xc = x - mean
    var = jnp.sum(xc * xc, axis=-1, keepdims=True) * inv_c
    inv = jax.lax.rsqrt(var + eps)  # EUP

    gamma = gamma_ref[...].astype(jnp.float32)  # (1, C) -> broadcast over rows
    beta = beta_ref[...].astype(jnp.float32)    # (1, C)
    out_ref[...] = (xc * inv * gamma + beta).astype(out_ref.dtype)


def add_layernorm(x180, x194, gamma, beta, eps=1e-5):
    assert x180.shape == x194.shape
    orig_shape = x180.shape
    C = orig_shape[-1]
    assert gamma.shape == (C,) and beta.shape == (C,)

    rows = 1
    for d in orig_shape[:-1]:
        rows *= d

    a2 = x180.reshape(rows, C)
    b2 = x194.reshape(rows, C)
    g2 = gamma.reshape(1, C)
    bt2 = beta.reshape(1, C)

    # Tile selection:
    #  * rows <= 512 (the module's 196-row case): one full-array block,
    #    grid=(1,), zero padding, zero post-slice.
    #  * rows  > 512: 512-row tiles -> >=2 grid steps (shards across v7x's two
    #    TensorCores); 3 streamed arrays x 2 pipeline buffers x 512x512x4B
    #    ~ 6 MiB stays well inside every chip's scoped-VMEM default.  The
    #    trailing partial block (if any) is masked by Pallas, so no host pad.
    TR_MAX = 512
    tr = rows if rows <= TR_MAX else TR_MAX
    grid = (pl.cdiv(rows, tr),)

    kernel = functools.partial(add_layernorm_kernel, eps=eps, inv_c=1.0 / C)

    out = pl.pallas_call(
        kernel,
        out_shape=jax.ShapeDtypeStruct((rows, C), x180.dtype),
        grid=grid,
        in_specs=[
            pl.BlockSpec((tr, C), lambda i: (i, 0)),
            pl.BlockSpec((tr, C), lambda i: (i, 0)),
            pl.BlockSpec((1, C), lambda i: (0, 0)),   # gamma stays resident
            pl.BlockSpec((1, C), lambda i: (0, 0)),   # beta stays resident
        ],
        out_specs=pl.BlockSpec((tr, C), lambda i: (i, 0)),
        compiler_params=pltpu.CompilerParams(
            # Row tiles are fully independent -> shard across both TCs on v7x
            # whenever grid has >= 2 steps.
            dimension_semantics=("parallel",),
        ),
    )(a2, b2, g2, bt2)

    return out.reshape(orig_shape)

# TODO(synk): at this 1x14x14x512 size the dominant remaining cost is kernel
# launch overhead; the real win would be fusing add+LN into the producer or
# consumer op (or batching many such LN calls into one pallas_call).


if __name__ == "__main__":
    key = jax.random.PRNGKey(0)
    k1, k2 = jax.random.split(key)

    # Shapes implied by the module: x180, x194 : [1, 14, 14, 512]
    x180 = jax.random.normal(k1, (1, 14, 14, 512), dtype=jnp.float32)
    x194 = jax.random.normal(k2, (1, 14, 14, 512), dtype=jnp.float32)

    # nn.LayerNorm((512,), elementwise_affine=True) default init:
    # weight = ones, bias = zeros (deterministic).
    gamma = jnp.ones((512,), dtype=jnp.float32)
    beta = jnp.zeros((512,), dtype=jnp.float32)

    out = add_layernorm(x180, x194, gamma, beta, eps=1e-5)
    out = jax.block_until_ready(out)

    # Reference check in plain JAX (two-pass centered form).
    x = x180 + x194
    mean = jnp.mean(x, axis=-1, keepdims=True)
    var = jnp.mean((x - mean) ** 2, axis=-1, keepdims=True)
    ref = (x - mean) / jnp.sqrt(var + 1e-5) * gamma + beta
    assert out.shape == (1, 14, 14, 512)
    assert jnp.max(jnp.abs(out - ref)) < 1e-4

    print("KERNEL_OK")
</pallas_src>

<mosaic_0001>
module attributes {stable_mosaic.version = 11 : i64} {
  func.func @add_layernorm_kernel(%arg0: i32, %arg1: memref<196x512xf32, #tpu.memory_space<vmem>>, %arg2: memref<196x512xf32, #tpu.memory_space<vmem>>, %arg3: memref<1x512xf32, #tpu.memory_space<vmem>>, %arg4: memref<1x512xf32, #tpu.memory_space<vmem>>, %arg5: memref<196x512xf32, #tpu.memory_space<vmem>>) attributes {dimension_semantics = [#tpu.dimension_semantics<parallel>], iteration_bounds = array<i64: 1>, scalar_prefetch = 0 : i64, scratch_operands = 0 : i64, tpu.core_type = #tpu.core_type<tc>, window_params = [{transform_indices = @transform_0, window_bounds = array<i64: 196, 512>}, {transform_indices = @transform_1, window_bounds = array<i64: 196, 512>}, {pipeline_mode = #tpu.pipeline_mode<synchronous>, transform_indices = @transform_2, window_bounds = array<i64: 1, 512>}, {pipeline_mode = #tpu.pipeline_mode<synchronous>, transform_indices = @transform_3, window_bounds = array<i64: 1, 512>}, {transform_indices = @transform_4, window_bounds = array<i64: 196, 512>}]} {
    %c0 = arith.constant 0 : index
    %c0_0 = arith.constant 0 : index
    %0 = vector.load %arg1[%c0, %c0_0] : memref<196x512xf32, #tpu.memory_space<vmem>>, vector<196x512xf32>
    %c0_1 = arith.constant 0 : index
    %c0_2 = arith.constant 0 : index
    %1 = vector.load %arg2[%c0_1, %c0_2] : memref<196x512xf32, #tpu.memory_space<vmem>>, vector<196x512xf32>
    %2 = arith.addf %0, %1 : vector<196x512xf32>
    %cst = arith.constant dense<0.000000e+00> : vector<196xf32>
    %3 = vector.multi_reduction <add>, %2, %cst [1] : vector<196x512xf32> to vector<196xf32>
    %4 = vector.shape_cast %3 : vector<196xf32> to vector<196x1xf32>
    %cst_3 = arith.constant 0.001953125 : f32
    %5 = vector.broadcast %cst_3 : f32 to vector<196x1xf32>
    %6 = arith.mulf %4, %5 : vector<196x1xf32>
    %7 = vector.broadcast %6 : vector<196x1xf32> to vector<196x512xf32>
    %8 = arith.subf %2, %7 : vector<196x512xf32>
    %9 = arith.mulf %8, %8 : vector<196x512xf32>
    %cst_4 = arith.constant dense<0.000000e+00> : vector<196xf32>
    %10 = vector.multi_reduction <add>, %9, %cst_4 [1] : vector<196x512xf32> to vector<196xf32>
    %11 = vector.shape_cast %10 : vector<196xf32> to vector<196x1xf32>
    %cst_5 = arith.constant 0.001953125 : f32
    %12 = vector.broadcast %cst_5 : f32 to vector<196x1xf32>
    %13 = arith.mulf %11, %12 : vector<196x1xf32>
    %cst_6 = arith.constant 9.99999974E-6 : f32
    %14 = vector.broadcast %cst_6 : f32 to vector<196x1xf32>
    %15 = arith.addf %13, %14 : vector<196x1xf32>
    %16 = math.rsqrt %15 : vector<196x1xf32>
    %c0_7 = arith.constant 0 : index
    %c0_8 = arith.constant 0 : index
    %17 = vector.load %arg3[%c0_7, %c0_8] : memref<1x512xf32, #tpu.memory_space<vmem>>, vector<1x512xf32>
    %c0_9 = arith.constant 0 : index
    %c0_10 = arith.constant 0 : index
    %18 = vector.load %arg4[%c0_9, %c0_10] : memref<1x512xf32, #tpu.memory_space<vmem>>, vector<1x512xf32>
    %19 = vector.broadcast %16 : vector<196x1xf32> to vector<196x512xf32>
    %20 = arith.mulf %8, %19 : vector<196x512xf32>
    %21 = vector.broadcast %17 : vector<1x512xf32> to vector<196x512xf32>
    %22 = arith.mulf %20, %21 : vector<196x512xf32>
    %23 = vector.broadcast %18 : vector<1x512xf32> to vector<196x512xf32>
    %24 = arith.addf %22, %23 : vector<196x512xf32>
    %c0_11 = arith.constant 0 : index
    %c0_12 = arith.constant 0 : index
    %25 = vector.load %arg5[%c0_11, %c0_12] : memref<196x512xf32, #tpu.memory_space<vmem>>, vector<196x512xf32>
    tpu.vector_store %arg5[%c0_11, %c0_12], %24 {strides = array<i32>} : memref<196x512xf32, #tpu.memory_space<vmem>>, vector<196x512xf32>,
    return
  }
  func.func @transform_0(%arg0: i32) -> (i32, i32) {
    %c0_i32 = arith.constant 0 : i32
    %c0_i32_0 = arith.constant 0 : i32
    return %arg0, %c0_i32 : i32, i32
  }
  func.func @transform_1(%arg0: i32) -> (i32, i32) {
    %c0_i32 = arith.constant 0 : i32
    %c0_i32_0 = arith.constant 0 : i32
    return %arg0, %c0_i32 : i32, i32
  }
  func.func @transform_2(%arg0: i32) -> (i32, i32) {
    %c0_i32 = arith.constant 0 : i32
    %c0_i32_0 = arith.constant 0 : i32
    %c0_i32_1 = arith.constant 0 : i32
    return %c0_i32, %c0_i32_0 : i32, i32
  }
  func.func @transform_3(%arg0: i32) -> (i32, i32) {
    %c0_i32 = arith.constant 0 : i32
    %c0_i32_0 = arith.constant 0 : i32
    %c0_i32_1 = arith.constant 0 : i32
    return %c0_i32, %c0_i32_0 : i32, i32
  }
  func.func @transform_4(%arg0: i32) -> (i32, i32) {
    %c0_i32 = arith.constant 0 : i32
    %c0_i32_0 = arith.constant 0 : i32
    return %arg0, %c0_i32 : i32, i32
  }
}

</mosaic_0001>

<llo_original>
// kernel: tpu_custom_call.1
$region0: #{tpu_custom_call.1}
  #allocation0 [shape = 'u32[]', space=smem, size = 0x4, offset = 0x4, fixed_abs, tag = 'smem constant byte address 0x4 - core index']
  #allocation1 [shape = 'u32[144,128]{1,0:T(1,128)}', space=vmem, size = 0x12000, scoped, tag = 'internal scratch']
  %s0 = inlined_call_operand.hbm [shape: f32[196,512], index: 0, kind: input, shape index: {}]
  %s1 = inlined_call_operand.hbm [shape: f32[196,512], index: 1, kind: input, shape index: {}]
  %s2 = inlined_call_operand.vmem [shape: f32[1,512], index: 2, kind: input, shape index: {}]
  %s3 = inlined_call_operand.vmem [shape: f32[1,512], index: 3, kind: input, shape index: {}]
  %s4 = inlined_call_operand.hbm [shape: f32[196,512], index: 4, kind: output, shape index: {}]
  %s5 = sld [smem:[#allocation0]]
  $region34: #{tpu_custom_call.1} parent=0
    _
  %s7 = ssub.s32 1, %s5
  %s8 = scalar_select 0, %s7, %s5
  $region1: #{tpu_custom_call.1} parent=0
    #allocation2 [shape = 'u8[409600]{0}', space=vmem, size = 0x64000, scoped, tag = 'input window, operand 0, single buffered']
    #allocation3 [shape = 's32[1]{0}', space=sflag, size = 0x4, scoped, tag = 'scoped memory for tpu_custom_call.1']
    #allocation4 [shape = 's32[1]{0}', space=sflag, size = 0x4, scoped, tag = 'scoped memory for tpu_custom_call.1']
    #allocation5 [shape = 'u8[409600]{0}', space=vmem, size = 0x64000, scoped, tag = 'input window, operand 1, single buffered']
    #allocation6 [shape = 's32[1]{0}', space=sflag, size = 0x4, scoped, tag = 'scoped memory for tpu_custom_call.1']
    #allocation7 [shape = 'u8[409600]{0}', space=vmem, size = 0x64000, scoped, tag = 'output window, operand 0, single buffered']
    %9 = vsyncpa [#allocation3], 0
    %10 = vsyncpa [#allocation6], 0
    %11 = vsyncpa [#allocation4], 0
    // Predicated region
    $region2: #{tpu_custom_call.1} parent=1 // pred_check
      _
    $region3: #{tpu_custom_call.1} parent=1 // pred_check_branch
      %13 = sbr.rel (0) target = $region5
    $region4: #{tpu_custom_call.1} parent=1 // pred_region
      %s15 = ssub.s32 12800, 12800
      %16 = vsyncadd [#allocation3], %s15
      %s17 = sshll.u32 [#allocation2], 4
      %s18 = int_to_ptr.vmem [resolvable:$true] %s17
      %23 = dma.hbm_to_vmem [thread:$0]  %s0, 12800, %s18, [#allocation3], 512, 512, 32
    $region5: #{tpu_custom_call.1} parent=1 // pred_fallthru
      _
    // Predicated region
    $region6: #{tpu_custom_call.1} parent=1 // pred_check
      _
    $region7: #{tpu_custom_call.1} parent=1 // pred_check_branch
      %25 = sbr.rel (0) target = $region9
    $region8: #{tpu_custom_call.1} parent=1 // pred_region
      %s27 = ssub.s32 12800, 12800
      %28 = vsyncadd [#allocation6], %s27
      %s29 = sshll.u32 [#allocation5], 4
      %s30 = int_to_ptr.vmem [resolvable:$true] %s29
      %35 = dma.hbm_to_vmem [thread:$0]  %s1, 12800, %s30, [#allocation6], 512, 512, 32
    $region9: #{tpu_custom_call.1} parent=1 // pred_fallthru
      _
    // Predicated region
    $region10: #{tpu_custom_call.1} parent=1 // pred_check
      _
    $region11: #{tpu_custom_call.1} parent=1 // pred_check_branch
      %37 = sbr.rel (0) target = $region13
    $region12: #{tpu_custom_call.1} parent=1 // pred_region
      _
    $region13: #{tpu_custom_call.1} parent=1 // pred_fallthru
      _
    // Predicated region
    $region14: #{tpu_custom_call.1} parent=1 // pred_check
      _
    $region15: #{tpu_custom_call.1} parent=1 // pred_check_branch
      %39 = sbr.rel (0) target = $region17
    $region16: #{tpu_custom_call.1} parent=1 // pred_region
      _
    $region17: #{tpu_custom_call.1} parent=1 // pred_fallthru
      _
    // Predicated region
    $region18: #{tpu_custom_call.1} parent=1 // pred_check
      _
    $region19: #{tpu_custom_call.1} parent=1 // pred_check_branch
      %41 = sbr.rel (0) target = $region21
    $region20: #{tpu_custom_call.1} parent=1 // pred_region
      %42 = dma.done [#allocation3], 12800
    $region21: #{tpu_custom_call.1} parent=1 // pred_fallthru
      _
    // Predicated region
    $region22: #{tpu_custom_call.1} parent=1 // pred_check
      _
    $region23: #{tpu_custom_call.1} parent=1 // pred_check_branch
      %44 = sbr.rel (0) target = $region25
    $region24: #{tpu_custom_call.1} parent=1 // pred_region
      %45 = dma.done [#allocation6], 12800
    $region25: #{tpu_custom_call.1} parent=1 // pred_fallthru
      _
    %v46 = vld [vmem:[#allocation2] sm:$0xff]
    %v47 = vld [vmem:[#allocation2 + $0x8] sm:$0xff]
    %v48 = vld [vmem:[#allocation2 + $0x10] sm:$0xff]
    %v49 = vld [vmem:[#allocation2 + $0x18] sm:$0xff]
    %v50 = vld [vmem:[#allocation2 + $0x20] sm:$0xff]
    %v51 = vld [vmem:[#allocation2 + $0x28] sm:$0xff]
    %v52 = vld [vmem:[#allocation2 + $0x30] sm:$0xff]
    %v53 = vld [vmem:[#allocation2 + $0x38] sm:$0xff]
    %v54 = vld [vmem:[#allocation2 + $0x40] sm:$0xff]
    %v55 = vld [vmem:[#allocation2 + $0x48] sm:$0xff]
    %v56 = vld [vmem:[#allocation2 + $0x50] sm:$0xff]
    %v57 = vld [vmem:[#allocation2 + $0x58] sm:$0xff]
    %v58 = vld [vmem:[#allocation2 + $0x60] sm:$0xff]
    %v59 = vld [vmem:[#allocation2 + $0x68] sm:$0xff]
    %v60 = vld [vmem:[#allocation2 + $0x70] sm:$0xff]
    %v61 = vld [vmem:[#allocation2 + $0x78] sm:$0xff]
    %v62 = vld [vmem:[#allocation2 + $0x80] sm:$0xff]
    %v63 = vld [vmem:[#allocation2 + $0x88] sm:$0xff]
    %v64 = vld [vmem:[#allocation2 + $0x90] sm:$0xff]
    %v65 = vld [vmem:[#allocation2 + $0x98] sm:$0xff]
    %v66 = vld [vmem:[#allocation2 + $0xa0] sm:$0xff]
    %v67 = vld [vmem:[#allocation2 + $0xa8] sm:$0xff]
    %v68 = vld [vmem:[#allocation2 + $0xb0] sm:$0xff]
    %v69 = vld [vmem:[#allocation2 + $0xb8] sm:$0xff]
    %v70 = vld [vmem:[#allocation2 + $0xc0] sm:$0xff]
    %v71 = vld [vmem:[#allocation2 + $0xc8] sm:$0xff]
    %v72 = vld [vmem:[#allocation2 + $0xd0] sm:$0xff]
    %v73 = vld [vmem:[#allocation2 + $0xd8] sm:$0xff]
    %v74 = vld [vmem:[#allocation2 + $0xe0] sm:$0xff]
    %v75 = vld [vmem:[#allocation2 + $0xe8] sm:$0xff]
    %v76 = vld [vmem:[#allocation2 + $0xf0] sm:$0xff]
    %v77 = vld [vmem:[#allocation2 + $0xf8] sm:$0xff]
    %v78 = vld [vmem:[#allocation2 + $0x100] sm:$0xff]
    %v79 = vld [vmem:[#allocation2 + $0x108] sm:$0xff]
    %v80 = vld [vmem:[#allocation2 + $0x110] sm:$0xff]
    %v81 = vld [vmem:[#allocation2 + $0x118] sm:$0xff]
    %v82 = vld [vmem:[#allocation2 + $0x120] sm:$0xff]
    %v83 = vld [vmem:[#allocation2 + $0x128] sm:$0xff]
    %v84 = vld [vmem:[#allocation2 + $0x130] sm:$0xff]
    %v85 = vld [vmem:[#allocation2 + $0x138] sm:$0xff]
    %v86 = vld [vmem:[#allocation2 + $0x140] sm:$0xff]
    %v87 = vld [vmem:[#allocation2 + $0x148] sm:$0xff]
    %v88 = vld [vmem:[#allocation2 + $0x150] sm:$0xff]
    %v89 = vld [vmem:[#allocation2 + $0x158] sm:$0xff]
    %v90 = vld [vmem:[#allocation2 + $0x160] sm:$0xff]
    %v91 = vld [vmem:[#allocation2 + $0x168] sm:$0xff]
    %v92 = vld [vmem:[#allocation2 + $0x170] sm:$0xff]
    %v93 = vld [vmem:[#allocation2 + $0x178] sm:$0xff]
    %v94 = vld [vmem:[#allocation2 + $0x180] sm:$0xff]
    %v95 = vld [vmem:[#allocation2 + $0x188] sm:$0xff]
    %v96 = vld [vmem:[#allocation2 + $0x190] sm:$0xff]
    %v97 = vld [vmem:[#allocation2 + $0x198] sm:$0xff]
    %v98 = vld [vmem:[#allocation2 + $0x1a0] sm:$0xff]
    %v99 = vld [vmem:[#allocation2 + $0x1a8] sm:$0xff]
    %v100 = vld [vmem:[#allocation2 + $0x1b0] sm:$0xff]
    %v101 = vld [vmem:[#allocation2 + $0x1b8] sm:$0xff]
    %v102 = vld [vmem:[#allocation2 + $0x1c0] sm:$0xff]
    %v103 = vld [vmem:[#allocation2 + $0x1c8] sm:$0xff]
    %v104 = vld [vmem:[#allocation2 + $0x1d0] sm:$0xff]
    %v105 = vld [vmem:[#allocation2 + $0x1d8] sm:$0xff]
    %v106 = vld [vmem:[#allocation2 + $0x1e0] sm:$0xff]
    %v107 = vld [vmem:[#allocation2 + $0x1e8] sm:$0xff]
    %v108 = vld [vmem:[#allocation2 + $0x1f0] sm:$0xff]
    %v109 = vld [vmem:[#allocation2 + $0x1f8] sm:$0xff]
    %v110 = vld [vmem:[#allocation2 + $0x200] sm:$0xff]
    %v111 = vld [vmem:[#allocation2 + $0x208] sm:$0xff]
    %v112 = vld [vmem:[#allocation2 + $0x210] sm:$0xff]
    %v113 = vld [vmem:[#allocation2 + $0x218] sm:$0xff]
    %v114 = vld [vmem:[#allocation2 + $0x220] sm:$0xff]
    %v115 = vld [vmem:[#allocation2 + $0x228] sm:$0xff]
    %v116 = vld [vmem:[#allocation2 + $0x230] sm:$0xff]
    %v117 = vld [vmem:[#allocation2 + $0x238] sm:$0xff]
    %v118 = vld [vmem:[#allocation2 + $0x240] sm:$0xff]
    %v119 = vld [vmem:[#allocation2 + $0x248] sm:$0xff]
    %v120 = vld [vmem:[#allocation2 + $0x250] sm:$0xff]
    %v121 = vld [vmem:[#allocation2 + $0x258] sm:$0xff]
    %v122 = vld [vmem:[#allocation2 + $0x260] sm:$0xff]
    %v123 = vld [vmem:[#allocation2 + $0x268] sm:$0xff]
    %v124 = vld [vmem:[#allocation2 + $0x270] sm:$0xff]
    %v125 = vld [vmem:[#allocation2 + $0x278] sm:$0xff]
    %v126 = vld [vmem:[#allocation2 + $0x280] sm:$0xff]
    %v127 = vld [vmem:[#allocation2 + $0x288] sm:$0xff]
    %v128 = vld [vmem:[#allocation2 + $0x290] sm:$0xff]
    %v129 = vld [vmem:[#allocation2 + $0x298] sm:$0xff]
    %v130 = vld [vmem:[#allocation2 + $0x2a0] sm:$0xff]
    %v131 = vld [vmem:[#allocation2 + $0x2a8] sm:$0xff]
    %v132 = vld [vmem:[#allocation2 + $0x2b0] sm:$0xff]
    %v133 = vld [vmem:[#allocation2 + $0x2b8] sm:$0xff]
    %v134 = vld [vmem:[#allocation2 + $0x2c0] sm:$0xff]
    %v135 = vld [vmem:[#allocation2 + $0x2c8] sm:$0xff]
    %v136 = vld [vmem:[#allocation2 + $0x2d0] sm:$0xff]
    %v137 = vld [vmem:[#allocation2 + $0x2d8] sm:$0xff]
    %v138 = vld [vmem:[#allocation2 + $0x2e0] sm:$0xff]
    %v139 = vld [vmem:[#allocation2 + $0x2e8] sm:$0xff]
    %v140 = vld [vmem:[#allocation2 + $0x2f0] sm:$0xff]
    %v141 = vld [vmem:[#allocation2 + $0x2f8] sm:$0xff]
    %v142 = vld [vmem:[#allocation2 + $0x300] sm:$0xf]
    %v143 = vld [vmem:[#allocation2 + $0x308] sm:$0xf]
    %v144 = vld [vmem:[#allocation2 + $0x310] sm:$0xf]
    %v145 = vld [vmem:[#allocation2 + $0x318] sm:$0xf]
    %v146 = vld [vmem:[#allocation5] sm:$0xff]
    %v147 = vld [vmem:[#allocation5 + $0x8] sm:$0xff]
    %v148 = vld [vmem:[#allocation5 + $0x10] sm:$0xff]
    %v149 = vld [vmem:[#allocation5 + $0x18] sm:$0xff]
    %v150 = vld [vmem:[#allocation5 + $0x20] sm:$0xff]
    %v151 = vld [vmem:[#allocation5 + $0x28] sm:$0xff]
    %v152 = vld [vmem:[#allocation5 + $0x30] sm:$0xff]
    %v153 = vld [vmem:[#allocation5 + $0x38] sm:$0xff]
    %v154 = vld [vmem:[#allocation5 + $0x40] sm:$0xff]
    %v155 = vld [vmem:[#allocation5 + $0x48] sm:$0xff]
    %v156 = vld [vmem:[#allocation5 + $0x50] sm:$0xff]
    %v157 = vld [vmem:[#allocation5 + $0x58] sm:$0xff]
    %v158 = vld [vmem:[#allocation5 + $0x60] sm:$0xff]
    %v159 = vld [vmem:[#allocation5 + $0x68] sm:$0xff]
    %v160 = vld [vmem:[#allocation5 + $0x70] sm:$0xff]
    %v161 = vld [vmem:[#allocation5 + $0x78] sm:$0xff]
    %v162 = vld [vmem:[#allocation5 + $0x80] sm:$0xff]
    %v163 = vld [vmem:[#allocation5 + $0x88] sm:$0xff]
    %v164 = vld [vmem:[#allocation5 + $0x90] sm:$0xff]
    %v165 = vld [vmem:[#allocation5 + $0x98] sm:$0xff]
    %v166 = vld [vmem:[#allocation5 + $0xa0] sm:$0xff]
    %v167 = vld [vmem:[#allocation5 + $0xa8] sm:$0xff]
    %v168 = vld [vmem:[#allocation5 + $0xb0] sm:$0xff]
    %v169 = vld [vmem:[#allocation5 + $0xb8] sm:$0xff]
    %v170 = vld [vmem:[#allocation5 + $0xc0] sm:$0xff]
    %v171 = vld [vmem:[#allocation5 + $0xc8] sm:$0xff]
    %v172 = vld [vmem:[#allocation5 + $0xd0] sm:$0xff]
    %v173 = vld [vmem:[#allocation5 + $0xd8] sm:$0xff]
    %v174 = vld [vmem:[#allocation5 + $0xe0] sm:$0xff]
    %v175 = vld [vmem:[#allocation5 + $0xe8] sm:$0xff]
    %v176 = vld [vmem:[#allocation5 + $0xf0] sm:$0xff]
    %v177 = vld [vmem:[#allocation5 + $0xf8] sm:$0xff]
    %v178 = vld [vmem:[#allocation5 + $0x100] sm:$0xff]
    %v179 = vld [vmem:[#allocation5 + $0x108] sm:$0xff]
    %v180 = vld [vmem:[#allocation5 + $0x110] sm:$0xff]
    %v181 = vld [vmem:[#allocation5 + $0x118] sm:$0xff]
    %v182 = vld [vmem:[#allocation5 + $0x120] sm:$0xff]
    %v183 = vld [vmem:[#allocation5 + $0x128] sm:$0xff]
    %v184 = vld [vmem:[#allocation5 + $0x130] sm:$0xff]
    %v185 = vld [vmem:[#allocation5 + $0x138] sm:$0xff]
    %v186 = vld [vmem:[#allocation5 + $0x140] sm:$0xff]
    %v187 = vld [vmem:[#allocation5 + $0x148] sm:$0xff]
    %v188 = vld [vmem:[#allocation5 + $0x150] sm:$0xff]
    %v189 = vld [vmem:[#allocation5 + $0x158] sm:$0xff]
    %v190 = vld [vmem:[#allocation5 + $0x160] sm:$0xff]
    %v191 = vld [vmem:[#allocation5 + $0x168] sm:$0xff]
    %v192 = vld [vmem:[#allocation5 + $0x170] sm:$0xff]
    %v193 = vld [vmem:[#allocation5 + $0x178] sm:$0xff]
    %v194 = vld [vmem:[#allocation5 + $0x180] sm:$0xff]
    %v195 = vld [vmem:[#allocation5 + $0x188] sm:$0xff]
    %v196 = vld [vmem:[#allocation5 + $0x190] sm:$0xff]
    %v197 = vld [vmem:[#allocation5 + $0x198] sm:$0xff]
    %v198 = vld [vmem:[#allocation5 + $0x1a0] sm:$0xff]
    %v199 = vld [vmem:[#allocation5 + $0x1a8] sm:$0xff]
    %v200 = vld [vmem:[#allocation5 + $0x1b0] sm:$0xff]
    %v201 = vld [vmem:[#allocation5 + $0x1b8] sm:$0xff]
    %v202 = vld [vmem:[#allocation5 + $0x1c0] sm:$0xff]
    %v203 = vld [vmem:[#allocation5 + $0x1c8] sm:$0xff]
    %v204 = vld [vmem:[#allocation5 + $0x1d0] sm:$0xff]
    %v205 = vld [vmem:[#allocation5 + $0x1d8] sm:$0xff]
    %v206 = vld [vmem:[#allocation5 + $0x1e0] sm:$0xff]
    %v207 = vld [vmem:[#allocation5 + $0x1e8] sm:$0xff]
    %v208 = vld [vmem:[#allocation5 + $0x1f0] sm:$0xff]
    %v209 = vld [vmem:[#allocation5 + $0x1f8] sm:$0xff]
    %v210 = vld [vmem:[#allocation5 + $0x200] sm:$0xff]
    %v211 = vld [vmem:[#allocation5 + $0x208] sm:$0xff]
    %v212 = vld [vmem:[#allocation5 + $0x210] sm:$0xff]
    %v213 = vld [vmem:[#allocation5 + $0x218] sm:$0xff]
    %v214 = vld [vmem:[#allocation5 + $0x220] sm:$0xff]
    %v215 = vld [vmem:[#allocation5 + $0x228] sm:$0xff]
    %v216 = vld [vmem:[#allocation5 + $0x230] sm:$0xff]
    %v217 = vld [vmem:[#allocation5 + $0x238] sm:$0xff]
    %v218 = vld [vmem:[#allocation5 + $0x240] sm:$0xff]
    %v219 = vld [vmem:[#allocation5 + $0x248] sm:$0xff]
    %v220 = vld [vmem:[#allocation5 + $0x250] sm:$0xff]
    %v221 = vld [vmem:[#allocation5 + $0x258] sm:$0xff]
    %v222 = vld [vmem:[#allocation5 + $0x260] sm:$0xff]
    %v223 = vld [vmem:[#allocation5 + $0x268] sm:$0xff]
    %v224 = vld [vmem:[#allocation5 + $0x270] sm:$0xff]
    %v225 = vld [vmem:[#allocation5 + $0x278] sm:$0xff]
    %v226 = vld [vmem:[#allocation5 + $0x280] sm:$0xff]
    %v227 = vld [vmem:[#allocation5 + $0x288] sm:$0xff]
    %v228 = vld [vmem:[#allocation5 + $0x290] sm:$0xff]
    %v229 = vld [vmem:[#allocation5 + $0x298] sm:$0xff]
    %v230 = vld [vmem:[#allocation5 + $0x2a0] sm:$0xff]
    %v231 = vld [vmem:[#allocation5 + $0x2a8] sm:$0xff]
    %v232 = vld [vmem:[#allocation5 + $0x2b0] sm:$0xff]
    %v233 = vld [vmem:[#allocation5 + $0x2b8] sm:$0xff]
    %v234 = vld [vmem:[#allocation5 + $0x2c0] sm:$0xff]
    %v235 = vld [vmem:[#allocation5 + $0x2c8] sm:$0xff]
    %v236 = vld [vmem:[#allocation5 + $0x2d0] sm:$0xff]
    %v237 = vld [vmem:[#allocation5 + $0x2d8] sm:$0xff]
    %v238 = vld [vmem:[#allocation5 + $0x2e0] sm:$0xff]
    %v239 = vld [vmem:[#allocation5 + $0x2e8] sm:$0xff]
    %v240 = vld [vmem:[#allocation5 + $0x2f0] sm:$0xff]
    %v241 = vld [vmem:[#allocation5 + $0x2f8] sm:$0xff]
    %v242 = vld [vmem:[#allocation5 + $0x300] sm:$0xf]
    %v243 = vld [vmem:[#allocation5 + $0x308] sm:$0xf]
    %v244 = vld [vmem:[#allocation5 + $0x310] sm:$0xf]
    %v245 = vld [vmem:[#allocation5 + $0x318] sm:$0xf]
    %v246 = vadd.f32 %v46, %v146
    %v247 = vadd.f32 %v47, %v147
    %v248 = vadd.f32 %v48, %v148
    %v249 = vadd.f32 %v49, %v149
    %v250 = vadd.f32 %v50, %v150
    %v251 = vadd.f32 %v51, %v151
    %v252 = vadd.f32 %v52, %v152
    %v253 = vadd.f32 %v53, %v153
    %v254 = vadd.f32 %v54, %v154
    %v255 = vadd.f32 %v55, %v155
    %v256 = vadd.f32 %v56, %v156
    %v257 = vadd.f32 %v57, %v157
    %v258 = vadd.f32 %v58, %v158
    %v259 = vadd.f32 %v59, %v159
    %v260 = vadd.f32 %v60, %v160
    %v261 = vadd.f32 %v61, %v161
    %v262 = vadd.f32 %v62, %v162
    %v263 = vadd.f32 %v63, %v163
    %v264 = vadd.f32 %v64, %v164
    %v265 = vadd.f32 %v65, %v165
    %v266 = vadd.f32 %v66, %v166
    %v267 = vadd.f32 %v67, %v167
    %v268 = vadd.f32 %v68, %v168
    %v269 = vadd.f32 %v69, %v169
    %v270 = vadd.f32 %v70, %v170
    %v271 = vadd.f32 %v71, %v171
    %v272 = vadd.f32 %v72, %v172
    %v273 = vadd.f32 %v73, %v173
    %v274 = vadd.f32 %v74, %v174
    %v275 = vadd.f32 %v75, %v175
    %v276 = vadd.f32 %v76, %v176
    %v277 = vadd.f32 %v77, %v177
    %v278 = vadd.f32 %v78, %v178
    %v279 = vadd.f32 %v79, %v179
    %v280 = vadd.f32 %v80, %v180
    %v281 = vadd.f32 %v81, %v181
    %v282 = vadd.f32 %v82, %v182
    %v283 = vadd.f32 %v83, %v183
    %v284 = vadd.f32 %v84, %v184
    %v285 = vadd.f32 %v85, %v185
    %v286 = vadd.f32 %v86, %v186
    %v287 = vadd.f32 %v87, %v187
    %v288 = vadd.f32 %v88, %v188
    %v289 = vadd.f32 %v89, %v189
    %v290 = vadd.f32 %v90, %v190
    %v291 = vadd.f32 %v91, %v191
    %v292 = vadd.f32 %v92, %v192
    %v293 = vadd.f32 %v93, %v193
    %v294 = vadd.f32 %v94, %v194
    %v295 = vadd.f32 %v95, %v195
    %v296 = vadd.f32 %v96, %v196
    %v297 = vadd.f32 %v97, %v197
    %v298 = vadd.f32 %v98, %v198
    %v299 = vadd.f32 %v99, %v199
    %v300 = vadd.f32 %v100, %v200
    %v301 = vadd.f32 %v101, %v201
    %v302 = vadd.f32 %v102, %v202
    %v303 = vadd.f32 %v103, %v203
    %v304 = vadd.f32 %v104, %v204
    %v305 = vadd.f32 %v105, %v205
    %v306 = vadd.f32 %v106, %v206
    %v307 = vadd.f32 %v107, %v207
    %v308 = vadd.f32 %v108, %v208
    %v309 = vadd.f32 %v109, %v209
    %v310 = vadd.f32 %v110, %v210
    %v311 = vadd.f32 %v111, %v211
    %v312 = vadd.f32 %v112, %v212
    %v313 = vadd.f32 %v113, %v213
    %v314 = vadd.f32 %v114, %v214
    %v315 = vadd.f32 %v115, %v215
    %v316 = vadd.f32 %v116, %v216
    %v317 = vadd.f32 %v117, %v217
    %v318 = vadd.f32 %v118, %v218
    %v319 = vadd.f32 %v119, %v219
    %v320 = vadd.f32 %v120, %v220
    %v321 = vadd.f32 %v121, %v221
    %v322 = vadd.f32 %v122, %v222
    %v323 = vadd.f32 %v123, %v223
    %v324 = vadd.f32 %v124, %v224
    %v325 = vadd.f32 %v125, %v225
    %v326 = vadd.f32 %v126, %v226
    %v327 = vadd.f32 %v127, %v227
    %v328 = vadd.f32 %v128, %v228
    %v329 = vadd.f32 %v129, %v229
    %v330 = vadd.f32 %v130, %v230
    %v331 = vadd.f32 %v131, %v231
    %v332 = vadd.f32 %v132, %v232
    %v333 = vadd.f32 %v133, %v233
    %v334 = vadd.f32 %v134, %v234
    %v335 = vadd.f32 %v135, %v235
    %v336 = vadd.f32 %v136, %v236
    %v337 = vadd.f32 %v137, %v237
    %v338 = vadd.f32 %v138, %v238
    %v339 = vadd.f32 %v139, %v239
    %v340 = vadd.f32 %v140, %v240
    %v341 = vadd.f32 %v141, %v241
    %v342 = vadd.f32 %v142, %v242
    %v343 = vadd.f32 %v143, %v243
    %v344 = vadd.f32 %v144, %v244
    %v345 = vadd.f32 %v145, %v245
    %v346 = vadd.f32 %v246, %v247
    %v347 = vadd.f32 %v346, %v248
    %v348 = vadd.f32 %v347, %v249
    %349 = vadd.xlane.f32.xlu0 %v348
    %v350 = vpop.xlane.xlu0 %349
    %v351 = vadd.f32 %v250, %v251
    %v352 = vadd.f32 %v351, %v252
    %v353 = vadd.f32 %v352, %v253
    %354 = vadd.xlane.f32.xlu0 %v353
    %v355 = vpop.xlane.xlu0 %354
    %v356 = vadd.f32 %v254, %v255
    %v357 = vadd.f32 %v356, %v256
    %v358 = vadd.f32 %v357, %v257
    %359 = vadd.xlane.f32.xlu0 %v358
    %v360 = vpop.xlane.xlu0 %359
    %v361 = vadd.f32 %v258, %v259
    %v362 = vadd.f32 %v361, %v260
    %v363 = vadd.f32 %v362, %v261
    %364 = vadd.xlane.f32.xlu0 %v363
    %v365 = vpop.xlane.xlu0 %364
    %v366 = vadd.f32 %v262, %v263
    %v367 = vadd.f32 %v366, %v264
    %v368 = vadd.f32 %v367, %v265
    %369 = vadd.xlane.f32.xlu0 %v368
    %v370 = vpop.xlane.xlu0 %369
    %v371 = vadd.f32 %v266, %v267
    %v372 = vadd.f32 %v371, %v268
    %v373 = vadd.f32 %v372, %v269
    %374 = vadd.xlane.f32.xlu0 %v373
    %v375 = vpop.xlane.xlu0 %374
    %v376 = vadd.f32 %v270, %v271
    %v377 = vadd.f32 %v376, %v272
    %v378 = vadd.f32 %v377, %v273
    %379 = vadd.xlane.f32.xlu0 %v378
    %v380 = vpop.xlane.xlu0 %379
    %v381 = vadd.f32 %v274, %v275
    %v382 = vadd.f32 %v381, %v276
    %v383 = vadd.f32 %v382, %v277
    %384 = vadd.xlane.f32.xlu0 %v383
    %v385 = vpop.xlane.xlu0 %384
    %v386 = vadd.f32 %v278, %v279
    %v387 = vadd.f32 %v386, %v280
    %v388 = vadd.f32 %v387, %v281
    %389 = vadd.xlane.f32.xlu0 %v388
    %v390 = vpop.xlane.xlu0 %389
    %v391 = vadd.f32 %v282, %v283
    %v392 = vadd.f32 %v391, %v284
    %v393 = vadd.f32 %v392, %v285
    %394 = vadd.xlane.f32.xlu0 %v393
    %v395 = vpop.xlane.xlu0 %394
    %v396 = vadd.f32 %v286, %v287
    %v397 = vadd.f32 %v396, %v288
    %v398 = vadd.f32 %v397, %v289
    %399 = vadd.xlane.f32.xlu0 %v398
    %v400 = vpop.xlane.xlu0 %399
    %v401 = vadd.f32 %v290, %v291
    %v402 = vadd.f32 %v401, %v292
    %v403 = vadd.f32 %v402, %v293
    %404 = vadd.xlane.f32.xlu0 %v403
    %v405 = vpop.xlane.xlu0 %404
    %v406 = vadd.f32 %v294, %v295
    %v407 = vadd.f32 %v406, %v296
    %v408 = vadd.f32 %v407, %v297
    %409 = vadd.xlane.f32.xlu0 %v408
    %v410 = vpop.xlane.xlu0 %409
    %v411 = vadd.f32 %v298, %v299
    %v412 = vadd.f32 %v411, %v300
    %v413 = vadd.f32 %v412, %v301
    %414 = vadd.xlane.f32.xlu0 %v413
    %v415 = vpop.xlane.xlu0 %414
    %v416 = vadd.f32 %v302, %v303
    %v417 = vadd.f32 %v416, %v304
    %v418 = vadd.f32 %v417, %v305
    %419 = vadd.xlane.f32.xlu0 %v418
    %v420 = vpop.xlane.xlu0 %419
    %v421 = vadd.f32 %v306, %v307
    %v422 = vadd.f32 %v421, %v308
    %v423 = vadd.f32 %v422, %v309
    %424 = vadd.xlane.f32.xlu0 %v423
    %v425 = vpop.xlane.xlu0 %424
    %v426 = vadd.f32 %v310, %v311
    %v427 = vadd.f32 %v426, %v312
    %v428 = vadd.f32 %v427, %v313
    %429 = vadd.xlane.f32.xlu0 %v428
    %v430 = vpop.xlane.xlu0 %429
    %v431 = vadd.f32 %v314, %v315
    %v432 = vadd.f32 %v431, %v316
    %v433 = vadd.f32 %v432, %v317
    %434 = vadd.xlane.f32.xlu0 %v433
    %v435 = vpop.xlane.xlu0 %434
    %v436 = vadd.f32 %v318, %v319
    %v437 = vadd.f32 %v436, %v320
    %v438 = vadd.f32 %v437, %v321
    %439 = vadd.xlane.f32.xlu0 %v438
    %v440 = vpop.xlane.xlu0 %439
    %v441 = vadd.f32 %v322, %v323
    %v442 = vadd.f32 %v441, %v324
    %v443 = vadd.f32 %v442, %v325
    %444 = vadd.xlane.f32.xlu0 %v443
    %v445 = vpop.xlane.xlu0 %444
    %v446 = vadd.f32 %v326, %v327
    %v447 = vadd.f32 %v446, %v328
    %v448 = vadd.f32 %v447, %v329
    %449 = vadd.xlane.f32.xlu0 %v448
    %v450 = vpop.xlane.xlu0 %449
    %v451 = vadd.f32 %v330, %v331
    %v452 = vadd.f32 %v451, %v332
    %v453 = vadd.f32 %v452, %v333
    %454 = vadd.xlane.f32.xlu0 %v453
    %v455 = vpop.xlane.xlu0 %454
    %v456 = vadd.f32 %v334, %v335
    %v457 = vadd.f32 %v456, %v336
    %v458 = vadd.f32 %v457, %v337
    %459 = vadd.xlane.f32.xlu0 %v458
    %v460 = vpop.xlane.xlu0 %459
    %v461 = vadd.f32 %v338, %v339
    %v462 = vadd.f32 %v461, %v340
    %v463 = vadd.f32 %v462, %v341
    %464 = vadd.xlane.f32.xlu0 %v463
    %v465 = vpop.xlane.xlu0 %464
    %vm466 = vcmask 1043456
    %v467 = vsel %vm466, %v342, 0.0
    %v468 = vsel %vm466, %v343, 0.0
    %v469 = vadd.f32 %v467, %v468
    %v470 = vsel %vm466, %v344, 0.0
    %v471 = vadd.f32 %v469, %v470
    %v472 = vsel %vm466, %v345, 0.0
    %v473 = vadd.f32 %v471, %v472
    %474 = vadd.xlane.f32.xlu0 %v473
    %v475 = vpop.xlane.xlu0 %474
    %v476 = vmul.f32 %v350, 0.001953125
    %v477 = vmul.f32 %v355, 0.001953125
    %v478 = vmul.f32 %v360, 0.001953125
    %v479 = vmul.f32 %v365, 0.001953125
    %v480 = vmul.f32 %v370, 0.001953125
    %v481 = vmul.f32 %v375, 0.001953125
    %v482 = vmul.f32 %v380, 0.001953125
    %v483 = vmul.f32 %v385, 0.001953125
    %v484 = vmul.f32 %v390, 0.001953125
    %v485 = vmul.f32 %v395, 0.001953125
    %v486 = vmul.f32 %v400, 0.001953125
    %v487 = vmul.f32 %v405, 0.001953125
    %v488 = vmul.f32 %v410, 0.001953125
    %v489 = vmul.f32 %v415, 0.001953125
    %v490 = vmul.f32 %v420, 0.001953125
    %v491 = vmul.f32 %v425, 0.001953125
    %v492 = vmul.f32 %v430, 0.001953125
    %v493 = vmul.f32 %v435, 0.001953125
    %v494 = vmul.f32 %v440, 0.001953125
    %v495 = vmul.f32 %v445, 0.001953125
    %v496 = vmul.f32 %v450, 0.001953125
    %v497 = vmul.f32 %v455, 0.001953125
    %v498 = vmul.f32 %v460, 0.001953125
    %v499 = vmul.f32 %v465, 0.001953125
    %v500 = vmul.f32 %v475, 0.001953125
    %v501 = vsub.f32 %v246, %v476
    %v502 = vsub.f32 %v247, %v476
    %v503 = vsub.f32 %v248, %v476
    %v504 = vsub.f32 %v249, %v476
    %v505 = vsub.f32 %v250, %v477
    %v506 = vsub.f32 %v251, %v477
    %v507 = vsub.f32 %v252, %v477
    %v508 = vsub.f32 %v253, %v477
    %v509 = vsub.f32 %v254, %v478
    %v510 = vsub.f32 %v255, %v478
    %v511 = vsub.f32 %v256, %v478
    %v512 = vsub.f32 %v257, %v478
    %v513 = vsub.f32 %v258, %v479
    %v514 = vsub.f32 %v259, %v479
    %v515 = vsub.f32 %v260, %v479
    %v516 = vsub.f32 %v261, %v479
    %v517 = vsub.f32 %v262, %v480
    %v518 = vsub.f32 %v263, %v480
    %v519 = vsub.f32 %v264, %v480
    %v520 = vsub.f32 %v265, %v480
    %v521 = vsub.f32 %v266, %v481
    %v522 = vsub.f32 %v267, %v481
    %v523 = vsub.f32 %v268, %v481
    %v524 = vsub.f32 %v269, %v481
    %v525 = vsub.f32 %v270, %v482
    %v526 = vsub.f32 %v271, %v482
    %v527 = vsub.f32 %v272, %v482
    %v528 = vsub.f32 %v273, %v482
    %v529 = vsub.f32 %v274, %v483
    %v530 = vsub.f32 %v275, %v483
    %v531 = vsub.f32 %v276, %v483
    %v532 = vsub.f32 %v277, %v483
    %v533 = vsub.f32 %v278, %v484
    %v534 = vsub.f32 %v279, %v484
    %v535 = vsub.f32 %v280, %v484
    %v536 = vsub.f32 %v281, %v484
    %v537 = vsub.f32 %v282, %v485
    %v538 = vsub.f32 %v283, %v485
    %v539 = vsub.f32 %v284, %v485
    %v540 = vsub.f32 %v285, %v485
    %v541 = vsub.f32 %v286, %v486
    %v542 = vsub.f32 %v287, %v486
    %v543 = vsub.f32 %v288, %v486
    %v544 = vsub.f32 %v289, %v486
    %v545 = vsub.f32 %v290, %v487
    %v546 = vsub.f32 %v291, %v487
    %v547 = vsub.f32 %v292, %v487
    %v548 = vsub.f32 %v293, %v487
    %v549 = vsub.f32 %v294, %v488
    %v550 = vsub.f32 %v295, %v488
    %v551 = vsub.f32 %v296, %v488
    %v552 = vsub.f32 %v297, %v488
    %v553 = vsub.f32 %v298, %v489
    %v554 = vsub.f32 %v299, %v489
    %v555 = vsub.f32 %v300, %v489
    %v556 = vsub.f32 %v301, %v489
    %v557 = vsub.f32 %v302, %v490
    %v558 = vsub.f32 %v303, %v490
    %v559 = vsub.f32 %v304, %v490
    %v560 = vsub.f32 %v305, %v490
    %v561 = vsub.f32 %v306, %v491
    %v562 = vsub.f32 %v307, %v491
    %v563 = vsub.f32 %v308, %v491
    %v564 = vsub.f32 %v309, %v491
    %v565 = vsub.f32 %v310, %v492
    %v566 = vsub.f32 %v311, %v492
    %v567 = vsub.f32 %v312, %v492
    %v568 = vsub.f32 %v313, %v492
    %v569 = vsub.f32 %v314, %v493
    %v570 = vsub.f32 %v315, %v493
    %v571 = vsub.f32 %v316, %v493
    %v572 = vsub.f32 %v317, %v493
    %v573 = vsub.f32 %v318, %v494
    %v574 = vsub.f32 %v319, %v494
    %v575 = vsub.f32 %v320, %v494
    %v576 = vsub.f32 %v321, %v494
    %v577 = vsub.f32 %v322, %v495
    %v578 = vsub.f32 %v323, %v495
    %v579 = vsub.f32 %v324, %v495
    %v580 = vsub.f32 %v325, %v495
    %v581 = vsub.f32 %v326, %v496
    %v582 = vsub.f32 %v327, %v496
    %v583 = vsub.f32 %v328, %v496
    %v584 = vsub.f32 %v329, %v496
    %v585 = vsub.f32 %v330, %v497
    %v586 = vsub.f32 %v331, %v497
    %v587 = vsub.f32 %v332, %v497
    %v588 = vsub.f32 %v333, %v497
    %v589 = vsub.f32 %v334, %v498
    %v590 = vsub.f32 %v335, %v498
    %v591 = vsub.f32 %v336, %v498
    %v592 = vsub.f32 %v337, %v498
    %v593 = vsub.f32 %v338, %v499
    %v594 = vsub.f32 %v339, %v499
    %v595 = vsub.f32 %v340, %v499
    %v596 = vsub.f32 %v341, %v499
    %v597 = vsub.f32 %v342, %v500
    %v598 = vsub.f32 %v343, %v500
    %v599 = vsub.f32 %v344, %v500
    %v600 = vsub.f32 %v345, %v500
    %v601 = vmul.f32 %v501, %v501
    %v602 = vmul.f32 %v502, %v502
    %v603 = vmul.f32 %v503, %v503
    %v604 = vmul.f32 %v504, %v504
    %v605 = vmul.f32 %v505, %v505
    %v606 = vmul.f32 %v506, %v506
    %v607 = vmul.f32 %v507, %v507
    %v608 = vmul.f32 %v508, %v508
    %v609 = vmul.f32 %v509, %v509
    %v610 = vmul.f32 %v510, %v510
    %v611 = vmul.f32 %v511, %v511
    %v612 = vmul.f32 %v512, %v512
    %v613 = vmul.f32 %v513, %v513
    %v614 = vmul.f32 %v514, %v514
    %v615 = vmul.f32 %v515, %v515
    %v616 = vmul.f32 %v516, %v516
    %v617 = vmul.f32 %v517, %v517
    %v618 = vmul.f32 %v518, %v518
    %v619 = vmul.f32 %v519, %v519
    %v620 = vmul.f32 %v520, %v520
    %v621 = vmul.f32 %v521, %v521
    %v622 = vmul.f32 %v522, %v522
    %v623 = vmul.f32 %v523, %v523
    %v624 = vmul.f32 %v524, %v524
    %v625 = vmul.f32 %v525, %v525
    %v626 = vmul.f32 %v526, %v526
    %v627 = vmul.f32 %v527, %v527
    %v628 = vmul.f32 %v528, %v528
    %v629 = vmul.f32 %v529, %v529
    %v630 = vmul.f32 %v530, %v530
    %v631 = vmul.f32 %v531, %v531
    %v632 = vmul.f32 %v532, %v532
    %v633 = vmul.f32 %v533, %v533
    %v634 = vmul.f32 %v534, %v534
    %v635 = vmul.f32 %v535, %v535
    %v636 = vmul.f32 %v536, %v536
    %v637 = vmul.f32 %v537, %v537
    %v638 = vmul.f32 %v538, %v538
    %v639 = vmul.f32 %v539, %v539
    %v640 = vmul.f32 %v540, %v540
    %v641 = vmul.f32 %v541, %v541
    %v642 = vmul.f32 %v542, %v542
    %v643 = vmul.f32 %v543, %v543
    %v644 = vmul.f32 %v544, %v544
    %v645 = vmul.f32 %v545, %v545
    %v646 = vmul.f32 %v546, %v546
    %v647 = vmul.f32 %v547, %v547
    %v648 = vmul.f32 %v548, %v548
    %v649 = vmul.f32 %v549, %v549
    %v650 = vmul.f32 %v550, %v550
    %v651 = vmul.f32 %v551, %v551
    %v652 = vmul.f32 %v552, %v552
    %v653 = vmul.f32 %v553, %v553
    %v654 = vmul.f32 %v554, %v554
    %v655 = vmul.f32 %v555, %v555
    %v656 = vmul.f32 %v556, %v556
    %v657 = vmul.f32 %v557, %v557
    %v658 = vmul.f32 %v558, %v558
    %v659 = vmul.f32 %v559, %v559
    %v660 = vmul.f32 %v560, %v560
    %v661 = vmul.f32 %v561, %v561
    %v662 = vmul.f32 %v562, %v562
    %v663 = vmul.f32 %v563, %v563
    %v664 = vmul.f32 %v564, %v564
    %v665 = vmul.f32 %v565, %v565
    %v666 = vmul.f32 %v566, %v566
    %v667 = vmul.f32 %v567, %v567
    %v668 = vmul.f32 %v568, %v568
    %v669 = vmul.f32 %v569, %v569
    %v670 = vmul.f32 %v570, %v570
    %v671 = vmul.f32 %v571, %v571
    %v672 = vmul.f32 %v572, %v572
    %v673 = vmul.f32 %v573, %v573
    %v674 = vmul.f32 %v574, %v574
    %v675 = vmul.f32 %v575, %v575
    %v676 = vmul.f32 %v576, %v576
    %v677 = vmul.f32 %v577, %v577
    %v678 = vmul.f32 %v578, %v578
    %v679 = vmul.f32 %v579, %v579
    %v680 = vmul.f32 %v580, %v580
    %v681 = vmul.f32 %v581, %v581
    %v682 = vmul.f32 %v582, %v582
    %v683 = vmul.f32 %v583, %v583
    %v684 = vmul.f32 %v584, %v584
    %v685 = vmul.f32 %v585, %v585
    %v686 = vmul.f32 %v586, %v586
    %v687 = vmul.f32 %v587, %v587
    %v688 = vmul.f32 %v588, %v588
    %v689 = vmul.f32 %v589, %v589
    %v690 = vmul.f32 %v590, %v590
    %v691 = vmul.f32 %v591, %v591
    %v692 = vmul.f32 %v592, %v592
    %v693 = vmul.f32 %v593, %v593
    %v694 = vmul.f32 %v594, %v594
    %v695 = vmul.f32 %v595, %v595
    %v696 = vmul.f32 %v596, %v596
    %v697 = vmul.f32 %v597, %v597
    %v698 = vmul.f32 %v598, %v598
    %v699 = vmul.f32 %v599, %v599
    %v700 = vmul.f32 %v600, %v600
    %v701 = vadd.f32 %v601, %v602
    %v702 = vadd.f32 %v701, %v603
    %v703 = vadd.f32 %v702, %v604
    %704 = vadd.xlane.f32.xlu0 %v703
    %v705 = vpop.xlane.xlu0 %704
    %v706 = vadd.f32 %v605, %v606
    %v707 = vadd.f32 %v706, %v607
    %v708 = vadd.f32 %v707, %v608
    %709 = vadd.xlane.f32.xlu0 %v708
    %v710 = vpop.xlane.xlu0 %709
    %v711 = vadd.f32 %v609, %v610
    %v712 = vadd.f32 %v711, %v611
    %v713 = vadd.f32 %v712, %v612
    %714 = vadd.xlane.f32.xlu0 %v713
    %v715 = vpop.xlane.xlu0 %714
    %v716 = vadd.f32 %v613, %v614
    %v717 = vadd.f32 %v716, %v615
    %v718 = vadd.f32 %v717, %v616
    %719 = vadd.xlane.f32.xlu0 %v718
    %v720 = vpop.xlane.xlu0 %719
    %v721 = vadd.f32 %v617, %v618
    %v722 = vadd.f32 %v721, %v619
    %v723 = vadd.f32 %v722, %v620
    %724 = vadd.xlane.f32.xlu0 %v723
    %v725 = vpop.xlane.xlu0 %724
    %v726 = vadd.f32 %v621, %v622
    %v727 = vadd.f32 %v726, %v623
    %v728 = vadd.f32 %v727, %v624
    %729 = vadd.xlane.f32.xlu0 %v728
    %v730 = vpop.xlane.xlu0 %729
    %v731 = vadd.f32 %v625, %v626
    %v732 = vadd.f32 %v731, %v627
    %v733 = vadd.f32 %v732, %v628
    %734 = vadd.xlane.f32.xlu0 %v733
    %v735 = vpop.xlane.xlu0 %734
    %v736 = vadd.f32 %v629, %v630
    %v737 = vadd.f32 %v736, %v631
    %v738 = vadd.f32 %v737, %v632
    %739 = vadd.xlane.f32.xlu0 %v738
    %v740 = vpop.xlane.xlu0 %739
    %v741 = vadd.f32 %v633, %v634
    %v742 = vadd.f32 %v741, %v635
    %v743 = vadd.f32 %v742, %v636
    %744 = vadd.xlane.f32.xlu0 %v743
    %v745 = vpop.xlane.xlu0 %744
    %v746 = vadd.f32 %v637, %v638
    %v747 = vadd.f32 %v746, %v639
    %v748 = vadd.f32 %v747, %v640
    %749 = vadd.xlane.f32.xlu0 %v748
    %v750 = vpop.xlane.xlu0 %749
    %v751 = vadd.f32 %v641, %v642
    %v752 = vadd.f32 %v751, %v643
    %v753 = vadd.f32 %v752, %v644
    %754 = vadd.xlane.f32.xlu0 %v753
    %v755 = vpop.xlane.xlu0 %754
    %v756 = vadd.f32 %v645, %v646
    %v757 = vadd.f32 %v756, %v647
    %v758 = vadd.f32 %v757, %v648
    %759 = vadd.xlane.f32.xlu0 %v758
    %v760 = vpop.xlane.xlu0 %759
    %v761 = vadd.f32 %v649, %v650
    %v762 = vadd.f32 %v761, %v651
    %v763 = vadd.f32 %v762, %v652
    %764 = vadd.xlane.f32.xlu0 %v763
    %v765 = vpop.xlane.xlu0 %764
    %v766 = vadd.f32 %v653, %v654
    %v767 = vadd.f32 %v766, %v655
    %v768 = vadd.f32 %v767, %v656
    %769 = vadd.xlane.f32.xlu0 %v768
    %v770 = vpop.xlane.xlu0 %769
    %v771 = vadd.f32 %v657, %v658
    %v772 = vadd.f32 %v771, %v659
    %v773 = vadd.f32 %v772, %v660
    %774 = vadd.xlane.f32.xlu0 %v773
    %v775 = vpop.xlane.xlu0 %774
    %v776 = vadd.f32 %v661, %v662
    %v777 = vadd.f32 %v776, %v663
    %v778 = vadd.f32 %v777, %v664
    %779 = vadd.xlane.f32.xlu0 %v778
    %v780 = vpop.xlane.xlu0 %779
    %v781 = vadd.f32 %v665, %v666
    %v782 = vadd.f32 %v781, %v667
    %v783 = vadd.f32 %v782, %v668
    %784 = vadd.xlane.f32.xlu0 %v783
    %v785 = vpop.xlane.xlu0 %784
    %v786 = vadd.f32 %v669, %v670
    %v787 = vadd.f32 %v786, %v671
    %v788 = vadd.f32 %v787, %v672
    %789 = vadd.xlane.f32.xlu0 %v788
    %v790 = vpop.xlane.xlu0 %789
    %v791 = vadd.f32 %v673, %v674
    %v792 = vadd.f32 %v791, %v675
    %v793 = vadd.f32 %v792, %v676
    %794 = vadd.xlane.f32.xlu0 %v793
    %v795 = vpop.xlane.xlu0 %794
    %v796 = vadd.f32 %v677, %v678
    %v797 = vadd.f32 %v796, %v679
    %v798 = vadd.f32 %v797, %v680
    %799 = vadd.xlane.f32.xlu0 %v798
    %v800 = vpop.xlane.xlu0 %799
    %v801 = vadd.f32 %v681, %v682
    %v802 = vadd.f32 %v801, %v683
    %v803 = vadd.f32 %v802, %v684
    %804 = vadd.xlane.f32.xlu0 %v803
    %v805 = vpop.xlane.xlu0 %804
    %v806 = vadd.f32 %v685, %v686
    %v807 = vadd.f32 %v806, %v687
    %v808 = vadd.f32 %v807, %v688
    %809 = vadd.xlane.f32.xlu0 %v808
    %v810 = vpop.xlane.xlu0 %809
    %v811 = vadd.f32 %v689, %v690
    %v812 = vadd.f32 %v811, %v691
    %v813 = vadd.f32 %v812, %v692
    %814 = vadd.xlane.f32.xlu0 %v813
    %v815 = vpop.xlane.xlu0 %814
    %v816 = vadd.f32 %v693, %v694
    %v817 = vadd.f32 %v816, %v695
    %v818 = vadd.f32 %v817, %v696
    %819 = vadd.xlane.f32.xlu0 %v818
    %v820 = vpop.xlane.xlu0 %819
    %v821 = vsel %vm466, %v697, 0.0
    %v822 = vsel %vm466, %v698, 0.0
    %v823 = vadd.f32 %v821, %v822
    %v824 = vsel %vm466, %v699, 0.0
    %v825 = vadd.f32 %v823, %v824
    %v826 = vsel %vm466, %v700, 0.0
    %v827 = vadd.f32 %v825, %v826
    %828 = vadd.xlane.f32.xlu0 %v827
    %v829 = vpop.xlane.xlu0 %828
    %v830 = vmul.f32 %v705, 0.001953125
    %v831 = vmul.f32 %v710, 0.001953125
    %v832 = vmul.f32 %v715, 0.001953125
    %v833 = vmul.f32 %v720, 0.001953125
    %v834 = vmul.f32 %v725, 0.001953125
    %v835 = vmul.f32 %v730, 0.001953125
    %v836 = vmul.f32 %v735, 0.001953125
    %v837 = vmul.f32 %v740, 0.001953125
    %v838 = vmul.f32 %v745, 0.001953125
    %v839 = vmul.f32 %v750, 0.001953125
    %v840 = vmul.f32 %v755, 0.001953125
    %v841 = vmul.f32 %v760, 0.001953125
    %v842 = vmul.f32 %v765, 0.001953125
    %v843 = vmul.f32 %v770, 0.001953125
    %v844 = vmul.f32 %v775, 0.001953125
    %v845 = vmul.f32 %v780, 0.001953125
    %v846 = vmul.f32 %v785, 0.001953125
    %v847 = vmul.f32 %v790, 0.001953125
    %v848 = vmul.f32 %v795, 0.001953125
    %v849 = vmul.f32 %v800, 0.001953125
    %v850 = vmul.f32 %v805, 0.001953125
    %v851 = vmul.f32 %v810, 0.001953125
    %v852 = vmul.f32 %v815, 0.001953125
    %v853 = vmul.f32 %v820, 0.001953125
    %v854 = vmul.f32 %v829, 0.001953125
    %v855 = vadd.f32 %v830, 1e-05
    %v856 = vadd.f32 %v831, 1e-05
    %v857 = vadd.f32 %v832, 1e-05
    %v858 = vadd.f32 %v833, 1e-05
    %v859 = vadd.f32 %v834, 1e-05
    %v860 = vadd.f32 %v835, 1e-05
    %v861 = vadd.f32 %v836, 1e-05
    %v862 = vadd.f32 %v837, 1e-05
    %v863 = vadd.f32 %v838, 1e-05
    %v864 = vadd.f32 %v839, 1e-05
    %v865 = vadd.f32 %v840, 1e-05
    %v866 = vadd.f32 %v841, 1e-05
    %v867 = vadd.f32 %v842, 1e-05
    %v868 = vadd.f32 %v843, 1e-05
    %v869 = vadd.f32 %v844, 1e-05
    %v870 = vadd.f32 %v845, 1e-05
    %v871 = vadd.f32 %v846, 1e-05
    %v872 = vadd.f32 %v847, 1e-05
    %v873 = vadd.f32 %v848, 1e-05
    %v874 = vadd.f32 %v849, 1e-05
    %v875 = vadd.f32 %v850, 1e-05
    %v876 = vadd.f32 %v851, 1e-05
    %v877 = vadd.f32 %v852, 1e-05
    %v878 = vadd.f32 %v853, 1e-05
    %v879 = vadd.f32 %v854, 1e-05
    %v880 = vrsqrt.pop %v855
    %v881 = vrsqrt.pop %v856
    %v882 = vrsqrt.pop %v857
    %v883 = vrsqrt.pop %v858
    %v884 = vrsqrt.pop %v859
    %v885 = vrsqrt.pop %v860
    %v886 = vrsqrt.pop %v861
    %v887 = vrsqrt.pop %v862
    %v888 = vrsqrt.pop %v863
    %v889 = vrsqrt.pop %v864
    %v890 = vrsqrt.pop %v865
    %v891 = vrsqrt.pop %v866
    %v892 = vrsqrt.pop %v867
    %v893 = vrsqrt.pop %v868
    %v894 = vrsqrt.pop %v869
    %v895 = vrsqrt.pop %v870
    %v896 = vrsqrt.pop %v871
    %v897 = vrsqrt.pop %v872
    %v898 = vrsqrt.pop %v873
    %v899 = vrsqrt.pop %v874
    %v900 = vrsqrt.pop %v875
    %v901 = vrsqrt.pop %v876
    %v902 = vrsqrt.pop %v877
    %v903 = vrsqrt.pop %v878
    %v904 = vrsqrt.pop %v879
    %v905 = vld [vmem:[%s2] sm:$0xf]
    %v906 = vld [vmem:[%s3] sm:$0xf]
    %v907 = vmul.f32 %v501, %v880
    %v908 = vmul.f32 %v502, %v880
    %v909 = vmul.f32 %v503, %v880
    %v910 = vmul.f32 %v504, %v880
    %v911 = vmul.f32 %v505, %v881
    %v912 = vmul.f32 %v506, %v881
    %v913 = vmul.f32 %v507, %v881
    %v914 = vmul.f32 %v508, %v881
    %v915 = vmul.f32 %v509, %v882
    %v916 = vmul.f32 %v510, %v882
    %v917 = vmul.f32 %v511, %v882
    %v918 = vmul.f32 %v512, %v882
    %v919 = vmul.f32 %v513, %v883
    %v920 = vmul.f32 %v514, %v883
    %v921 = vmul.f32 %v515, %v883
    %v922 = vmul.f32 %v516, %v883
    %v923 = vmul.f32 %v517, %v884
    %v924 = vmul.f32 %v518, %v884
    %v925 = vmul.f32 %v519, %v884
    %v926 = vmul.f32 %v520, %v884
    %v927 = vmul.f32 %v521, %v885
    %v928 = vmul.f32 %v522, %v885
    %v929 = vmul.f32 %v523, %v885
    %v930 = vmul.f32 %v524, %v885
    %v931 = vmul.f32 %v525, %v886
    %v932 = vmul.f32 %v526, %v886
    %v933 = vmul.f32 %v527, %v886
    %v934 = vmul.f32 %v528, %v886
    %v935 = vmul.f32 %v529, %v887
    %v936 = vmul.f32 %v530, %v887
    %v937 = vmul.f32 %v531, %v887
    %v938 = vmul.f32 %v532, %v887
    %v939 = vmul.f32 %v533, %v888
    %v940 = vmul.f32 %v534, %v888
    %v941 = vmul.f32 %v535, %v888
    %v942 = vmul.f32 %v536, %v888
    %v943 = vmul.f32 %v537, %v889
    %v944 = vmul.f32 %v538, %v889
    %v945 = vmul.f32 %v539, %v889
    %v946 = vmul.f32 %v540, %v889
    %v947 = vmul.f32 %v541, %v890
    %v948 = vmul.f32 %v542, %v890
    %v949 = vmul.f32 %v543, %v890
    %v950 = vmul.f32 %v544, %v890
    %v951 = vmul.f32 %v545, %v891
    %v952 = vmul.f32 %v546, %v891
    %v953 = vmul.f32 %v547, %v891
    %v954 = vmul.f32 %v548, %v891
    %v955 = vmul.f32 %v549, %v892
    %v956 = vmul.f32 %v550, %v892
    %v957 = vmul.f32 %v551, %v892
    %v958 = vmul.f32 %v552, %v892
    %v959 = vmul.f32 %v553, %v893
    %v960 = vmul.f32 %v554, %v893
    %v961 = vmul.f32 %v555, %v893
    %v962 = vmul.f32 %v556, %v893
    %v963 = vmul.f32 %v557, %v894
    %v964 = vmul.f32 %v558, %v894
    %v965 = vmul.f32 %v559, %v894
    %v966 = vmul.f32 %v560, %v894
    %v967 = vmul.f32 %v561, %v895
    %v968 = vmul.f32 %v562, %v895
    %v969 = vmul.f32 %v563, %v895
    %v970 = vmul.f32 %v564, %v895
    %v971 = vmul.f32 %v565, %v896
    %v972 = vmul.f32 %v566, %v896
    %v973 = vmul.f32 %v567, %v896
    %v974 = vmul.f32 %v568, %v896
    %v975 = vmul.f32 %v569, %v897
    %v976 = vmul.f32 %v570, %v897
    %v977 = vmul.f32 %v571, %v897
    %v978 = vmul.f32 %v572, %v897
    %v979 = vmul.f32 %v573, %v898
    %v980 = vmul.f32 %v574, %v898
    %v981 = vmul.f32 %v575, %v898
    %v982 = vmul.f32 %v576, %v898
    %v983 = vmul.f32 %v577, %v899
    %v984 = vmul.f32 %v578, %v899
    %v985 = vmul.f32 %v579, %v899
    %v986 = vmul.f32 %v580, %v899
    %v987 = vmul.f32 %v581, %v900
    %v988 = vmul.f32 %v582, %v900
    %v989 = vmul.f32 %v583, %v900
    %v990 = vmul.f32 %v584, %v900
    %v991 = vmul.f32 %v585, %v901
    %v992 = vmul.f32 %v586, %v901
    %v993 = vmul.f32 %v587, %v901
    %v994 = vmul.f32 %v588, %v901
    %v995 = vmul.f32 %v589, %v902
    %v996 = vmul.f32 %v590, %v902
    %v997 = vmul.f32 %v591, %v902
    %v998 = vmul.f32 %v592, %v902
    %v999 = vmul.f32 %v593, %v903
    %v1000 = vmul.f32 %v594, %v903
    %v1001 = vmul.f32 %v595, %v903
    %v1002 = vmul.f32 %v596, %v903
    %v1003 = vmul.f32 %v597, %v904
    %v1004 = vmul.f32 %v598, %v904
    %v1005 = vmul.f32 %v599, %v904
    %v1006 = vmul.f32 %v600, %v904
    %v1008 = vlaneseq
    %v1009 = vshrl.u32 %v1008, 7
    %v1010 = vsub.s32 0, %v1009
    %v1011 = vrot.slane %v905, %v1010
    %v1012 = vlaneseq
    %v1013 = vshrl.u32 %v1012, 7
    %v1014 = vsub.s32 1, %v1013
    %v1015 = vrot.slane %v905, %v1014
    %v1016 = vlaneseq
    %v1017 = vshrl.u32 %v1016, 7
    %v1018 = vsub.s32 2, %v1017
    %v1019 = vrot.slane %v905, %v1018
    %v1020 = vlaneseq
    %v1021 = vshrl.u32 %v1020, 7
    %v1022 = vsub.s32 3, %v1021
    %v1023 = vrot.slane %v905, %v1022
    %v1028 = vmul.f32 %v907, %v1011
    %v1029 = vmul.f32 %v908, %v1015
    %v1030 = vmul.f32 %v909, %v1019
    %v1031 = vmul.f32 %v910, %v1023
    %v1032 = vmul.f32 %v911, %v1011
    %v1033 = vmul.f32 %v912, %v1015
    %v1034 = vmul.f32 %v913, %v1019
    %v1035 = vmul.f32 %v914, %v1023
    %v1036 = vmul.f32 %v915, %v1011
    %v1037 = vmul.f32 %v916, %v1015
    %v1038 = vmul.f32 %v917, %v1019
    %v1039 = vmul.f32 %v918, %v1023
    %v1040 = vmul.f32 %v919, %v1011
    %v1041 = vmul.f32 %v920, %v1015
    %v1042 = vmul.f32 %v921, %v1019
    %v1043 = vmul.f32 %v922, %v1023
    %v1044 = vmul.f32 %v923, %v1011
    %v1045 = vmul.f32 %v924, %v1015
    %v1046 = vmul.f32 %v925, %v1019
    %v1047 = vmul.f32 %v926, %v1023
    %v1048 = vmul.f32 %v927, %v1011
    %v1049 = vmul.f32 %v928, %v1015
    %v1050 = vmul.f32 %v929, %v1019
    %v1051 = vmul.f32 %v930, %v1023
    %v1052 = vmul.f32 %v931, %v1011
    %v1053 = vmul.f32 %v932, %v1015
    %v1054 = vmul.f32 %v933, %v1019
    %v1055 = vmul.f32 %v934, %v1023
    %v1056 = vmul.f32 %v935, %v1011
    %v1057 = vmul.f32 %v936, %v1015
    %v1058 = vmul.f32 %v937, %v1019
    %v1059 = vmul.f32 %v938, %v1023
    %v1060 = vmul.f32 %v939, %v1011
    %v1061 = vmul.f32 %v940, %v1015
    %v1062 = vmul.f32 %v941, %v1019
    %v1063 = vmul.f32 %v942, %v1023
    %v1064 = vmul.f32 %v943, %v1011
    %v1065 = vmul.f32 %v944, %v1015
    %v1066 = vmul.f32 %v945, %v1019
    %v1067 = vmul.f32 %v946, %v1023
    %v1068 = vmul.f32 %v947, %v1011
    %v1069 = vmul.f32 %v948, %v1015
    %v1070 = vmul.f32 %v949, %v1019
    %v1071 = vmul.f32 %v950, %v1023
    %v1072 = vmul.f32 %v951, %v1011
    %v1073 = vmul.f32 %v952, %v1015
    %v1074 = vmul.f32 %v953, %v1019
    %v1075 = vmul.f32 %v954, %v1023
    %v1076 = vmul.f32 %v955, %v1011
    %v1077 = vmul.f32 %v956, %v1015
    %v1078 = vmul.f32 %v957, %v1019
    %v1079 = vmul.f32 %v958, %v1023
    %v1080 = vmul.f32 %v959, %v1011
    %v1081 = vmul.f32 %v960, %v1015
    %v1082 = vmul.f32 %v961, %v1019
    %v1083 = vmul.f32 %v962, %v1023
    %v1084 = vmul.f32 %v963, %v1011
    %v1085 = vmul.f32 %v964, %v1015
    %v1086 = vmul.f32 %v965, %v1019
    %v1087 = vmul.f32 %v966, %v1023
    %v1088 = vmul.f32 %v967, %v1011
    %v1089 = vmul.f32 %v968, %v1015
    %v1090 = vmul.f32 %v969, %v1019
    %v1091 = vmul.f32 %v970, %v1023
    %v1092 = vmul.f32 %v971, %v1011
    %v1093 = vmul.f32 %v972, %v1015
    %v1094 = vmul.f32 %v973, %v1019
    %v1095 = vmul.f32 %v974, %v1023
    %v1096 = vmul.f32 %v975, %v1011
    %v1097 = vmul.f32 %v976, %v1015
    %v1098 = vmul.f32 %v977, %v1019
    %v1099 = vmul.f32 %v978, %v1023
    %v1100 = vmul.f32 %v979, %v1011
    %v1101 = vmul.f32 %v980, %v1015
    %v1102 = vmul.f32 %v981, %v1019
    %v1103 = vmul.f32 %v982, %v1023
    %v1104 = vmul.f32 %v983, %v1011
    %v1105 = vmul.f32 %v984, %v1015
    %v1106 = vmul.f32 %v985, %v1019
    %v1107 = vmul.f32 %v986, %v1023
    %v1108 = vmul.f32 %v987, %v1011
    %v1109 = vmul.f32 %v988, %v1015
    %v1110 = vmul.f32 %v989, %v1019
    %v1111 = vmul.f32 %v990, %v1023
    %v1112 = vmul.f32 %v991, %v1011
    %v1113 = vmul.f32 %v992, %v1015
    %v1114 = vmul.f32 %v993, %v1019
    %v1115 = vmul.f32 %v994, %v1023
    %v1116 = vmul.f32 %v995, %v1011
    %v1117 = vmul.f32 %v996, %v1015
    %v1118 = vmul.f32 %v997, %v1019
    %v1119 = vmul.f32 %v998, %v1023
    %v1120 = vmul.f32 %v999, %v1011
    %v1121 = vmul.f32 %v1000, %v1015
    %v1122 = vmul.f32 %v1001, %v1019
    %v1123 = vmul.f32 %v1002, %v1023
    %v1124 = vmul.f32 %v1003, %v1011
    %v1125 = vmul.f32 %v1004, %v1015
    %v1126 = vmul.f32 %v1005, %v1019
    %v1127 = vmul.f32 %v1006, %v1023
    %v1129 = vlaneseq
    %v1130 = vshrl.u32 %v1129, 7
    %v1131 = vsub.s32 0, %v1130
    %v1132 = vrot.slane %v906, %v1131
    %v1133 = vlaneseq
    %v1134 = vshrl.u32 %v1133, 7
    %v1135 = vsub.s32 1, %v1134
    %v1136 = vrot.slane %v906, %v1135
    %v1137 = vlaneseq
    %v1138 = vshrl.u32 %v1137, 7
    %v1139 = vsub.s32 2, %v1138
    %v1140 = vrot.slane %v906, %v1139
    %v1141 = vlaneseq
    %v1142 = vshrl.u32 %v1141, 7
    %v1143 = vsub.s32 3, %v1142
    %v1144 = vrot.slane %v906, %v1143
    %v1149 = vadd.f32 %v1028, %v1132
    %v1150 = vadd.f32 %v1029, %v1136
    %v1151 = vadd.f32 %v1030, %v1140
    %v1152 = vadd.f32 %v1031, %v1144
    %v1153 = vadd.f32 %v1032, %v1132
    %v1154 = vadd.f32 %v1033, %v1136
    %v1155 = vadd.f32 %v1034, %v1140
    %v1156 = vadd.f32 %v1035, %v1144
    %v1157 = vadd.f32 %v1036, %v1132
    %v1158 = vadd.f32 %v1037, %v1136
    %v1159 = vadd.f32 %v1038, %v1140
    %v1160 = vadd.f32 %v1039, %v1144
    %v1161 = vadd.f32 %v1040, %v1132
    %v1162 = vadd.f32 %v1041, %v1136
    %v1163 = vadd.f32 %v1042, %v1140
    %v1164 = vadd.f32 %v1043, %v1144
    %v1165 = vadd.f32 %v1044, %v1132
    %v1166 = vadd.f32 %v1045, %v1136
    %v1167 = vadd.f32 %v1046, %v1140
    %v1168 = vadd.f32 %v1047, %v1144
    %v1169 = vadd.f32 %v1048, %v1132
    %v1170 = vadd.f32 %v1049, %v1136
    %v1171 = vadd.f32 %v1050, %v1140
    %v1172 = vadd.f32 %v1051, %v1144
    %v1173 = vadd.f32 %v1052, %v1132
    %v1174 = vadd.f32 %v1053, %v1136
    %v1175 = vadd.f32 %v1054, %v1140
    %v1176 = vadd.f32 %v1055, %v1144
    %v1177 = vadd.f32 %v1056, %v1132
    %v1178 = vadd.f32 %v1057, %v1136
    %v1179 = vadd.f32 %v1058, %v1140
    %v1180 = vadd.f32 %v1059, %v1144
    %v1181 = vadd.f32 %v1060, %v1132
    %v1182 = vadd.f32 %v1061, %v1136
    %v1183 = vadd.f32 %v1062, %v1140
    %v1184 = vadd.f32 %v1063, %v1144
    %v1185 = vadd.f32 %v1064, %v1132
    %v1186 = vadd.f32 %v1065, %v1136
    %v1187 = vadd.f32 %v1066, %v1140
    %v1188 = vadd.f32 %v1067, %v1144
    %v1189 = vadd.f32 %v1068, %v1132
    %v1190 = vadd.f32 %v1069, %v1136
    %v1191 = vadd.f32 %v1070, %v1140
    %v1192 = vadd.f32 %v1071, %v1144
    %v1193 = vadd.f32 %v1072, %v1132
    %v1194 = vadd.f32 %v1073, %v1136
    %v1195 = vadd.f32 %v1074, %v1140
    %v1196 = vadd.f32 %v1075, %v1144
    %v1197 = vadd.f32 %v1076, %v1132
    %v1198 = vadd.f32 %v1077, %v1136
    %v1199 = vadd.f32 %v1078, %v1140
    %v1200 = vadd.f32 %v1079, %v1144
    %v1201 = vadd.f32 %v1080, %v1132
    %v1202 = vadd.f32 %v1081, %v1136
    %v1203 = vadd.f32 %v1082, %v1140
    %v1204 = vadd.f32 %v1083, %v1144
    %v1205 = vadd.f32 %v1084, %v1132
    %v1206 = vadd.f32 %v1085, %v1136
    %v1207 = vadd.f32 %v1086, %v1140
    %v1208 = vadd.f32 %v1087, %v1144
    %v1209 = vadd.f32 %v1088, %v1132
    %v1210 = vadd.f32 %v1089, %v1136
    %v1211 = vadd.f32 %v1090, %v1140
    %v1212 = vadd.f32 %v1091, %v1144
    %v1213 = vadd.f32 %v1092, %v1132
    %v1214 = vadd.f32 %v1093, %v1136
    %v1215 = vadd.f32 %v1094, %v1140
    %v1216 = vadd.f32 %v1095, %v1144
    %v1217 = vadd.f32 %v1096, %v1132
    %v1218 = vadd.f32 %v1097, %v1136
    %v1219 = vadd.f32 %v1098, %v1140
    %v1220 = vadd.f32 %v1099, %v1144
    %v1221 = vadd.f32 %v1100, %v1132
    %v1222 = vadd.f32 %v1101, %v1136
    %v1223 = vadd.f32 %v1102, %v1140
    %v1224 = vadd.f32 %v1103, %v1144
    %v1225 = vadd.f32 %v1104, %v1132
    %v1226 = vadd.f32 %v1105, %v1136
    %v1227 = vadd.f32 %v1106, %v1140
    %v1228 = vadd.f32 %v1107, %v1144
    %v1229 = vadd.f32 %v1108, %v1132
    %v1230 = vadd.f32 %v1109, %v1136
    %v1231 = vadd.f32 %v1110, %v1140
    %v1232 = vadd.f32 %v1111, %v1144
    %v1233 = vadd.f32 %v1112, %v1132
    %v1234 = vadd.f32 %v1113, %v1136
    %v1235 = vadd.f32 %v1114, %v1140
    %v1236 = vadd.f32 %v1115, %v1144
    %v1237 = vadd.f32 %v1116, %v1132
    %v1238 = vadd.f32 %v1117, %v1136
    %v1239 = vadd.f32 %v1118, %v1140
    %v1240 = vadd.f32 %v1119, %v1144
    %v1241 = vadd.f32 %v1120, %v1132
    %v1242 = vadd.f32 %v1121, %v1136
    %v1243 = vadd.f32 %v1122, %v1140
    %v1244 = vadd.f32 %v1123, %v1144
    %v1245 = vadd.f32 %v1124, %v1132
    %v1246 = vadd.f32 %v1125, %v1136
    %v1247 = vadd.f32 %v1126, %v1140
    %v1248 = vadd.f32 %v1127, %v1144
    %1249 = vst [vmem:[#allocation7] sm:$0xff] %v1149
    %1250 = vst [vmem:[#allocation7 + $0x8] sm:$0xff] %v1150
    %1251 = vst [vmem:[#allocation7 + $0x10] sm:$0xff] %v1151
    %1252 = vst [vmem:[#allocation7 + $0x18] sm:$0xff] %v1152
    %1253 = vst [vmem:[#allocation7 + $0x20] sm:$0xff] %v1153
    %1254 = vst [vmem:[#allocation7 + $0x28] sm:$0xff] %v1154
    %1255 = vst [vmem:[#allocation7 + $0x30] sm:$0xff] %v1155
    %1256 = vst [vmem:[#allocation7 + $0x38] sm:$0xff] %v1156
    %1257 = vst [vmem:[#allocation7 + $0x40] sm:$0xff] %v1157
    %1258 = vst [vmem:[#allocation7 + $0x48] sm:$0xff] %v1158
    %1259 = vst [vmem:[#allocation7 + $0x50] sm:$0xff] %v1159
    %1260 = vst [vmem:[#allocation7 + $0x58] sm:$0xff] %v1160
    %1261 = vst [vmem:[#allocation7 + $0x60] sm:$0xff] %v1161
    %1262 = vst [vmem:[#allocation7 + $0x68] sm:$0xff] %v1162
    %1263 = vst [vmem:[#allocation7 + $0x70] sm:$0xff] %v1163
    %1264 = vst [vmem:[#allocation7 + $0x78] sm:$0xff] %v1164
    %1265 = vst [vmem:[#allocation7 + $0x80] sm:$0xff] %v1165
    %1266 = vst [vmem:[#allocation7 + $0x88] sm:$0xff] %v1166
    %1267 = vst [vmem:[#allocation7 + $0x90] sm:$0xff] %v1167
    %1268 = vst [vmem:[#allocation7 + $0x98] sm:$0xff] %v1168
    %1269 = vst [vmem:[#allocation7 + $0xa0] sm:$0xff] %v1169
    %1270 = vst [vmem:[#allocation7 + $0xa8] sm:$0xff] %v1170
    %1271 = vst [vmem:[#allocation7 + $0xb0] sm:$0xff] %v1171
    %1272 = vst [vmem:[#allocation7 + $0xb8] sm:$0xff] %v1172
    %1273 = vst [vmem:[#allocation7 + $0xc0] sm:$0xff] %v1173
    %1274 = vst [vmem:[#allocation7 + $0xc8] sm:$0xff] %v1174
    %1275 = vst [vmem:[#allocation7 + $0xd0] sm:$0xff] %v1175
    %1276 = vst [vmem:[#allocation7 + $0xd8] sm:$0xff] %v1176
    %1277 = vst [vmem:[#allocation7 + $0xe0] sm:$0xff] %v1177
    %1278 = vst [vmem:[#allocation7 + $0xe8] sm:$0xff] %v1178
    %1279 = vst [vmem:[#allocation7 + $0xf0] sm:$0xff] %v1179
    %1280 = vst [vmem:[#allocation7 + $0xf8] sm:$0xff] %v1180
    %1281 = vst [vmem:[#allocation7 + $0x100] sm:$0xff] %v1181
    %1282 = vst [vmem:[#allocation7 + $0x108] sm:$0xff] %v1182
    %1283 = vst [vmem:[#allocation7 + $0x110] sm:$0xff] %v1183
    %1284 = vst [vmem:[#allocation7 + $0x118] sm:$0xff] %v1184
    %1285 = vst [vmem:[#allocation7 + $0x120] sm:$0xff] %v1185
    %1286 = vst [vmem:[#allocation7 + $0x128] sm:$0xff] %v1186
    %1287 = vst [vmem:[#allocation7 + $0x130] sm:$0xff] %v1187
    %1288 = vst [vmem:[#allocation7 + $0x138] sm:$0xff] %v1188
    %1289 = vst [vmem:[#allocation7 + $0x140] sm:$0xff] %v1189
    %1290 = vst [vmem:[#allocation7 + $0x148] sm:$0xff] %v1190
    %1291 = vst [vmem:[#allocation7 + $0x150] sm:$0xff] %v1191
    %1292 = vst [vmem:[#allocation7 + $0x158] sm:$0xff] %v1192
    %1293 = vst [vmem:[#allocation7 + $0x160] sm:$0xff] %v1193
    %1294 = vst [vmem:[#allocation7 + $0x168] sm:$0xff] %v1194
    %1295 = vst [vmem:[#allocation7 + $0x170] sm:$0xff] %v1195
    %1296 = vst [vmem:[#allocation7 + $0x178] sm:$0xff] %v1196
    %1297 = vst [vmem:[#allocation7 + $0x180] sm:$0xff] %v1197
    %1298 = vst [vmem:[#allocation7 + $0x188] sm:$0xff] %v1198
    %1299 = vst [vmem:[#allocation7 + $0x190] sm:$0xff] %v1199
    %1300 = vst [vmem:[#allocation7 + $0x198] sm:$0xff] %v1200
    %1301 = vst [vmem:[#allocation7 + $0x1a0] sm:$0xff] %v1201
    %1302 = vst [vmem:[#allocation7 + $0x1a8] sm:$0xff] %v1202
    %1303 = vst [vmem:[#allocation7 + $0x1b0] sm:$0xff] %v1203
    %1304 = vst [vmem:[#allocation7 + $0x1b8] sm:$0xff] %v1204
    %1305 = vst [vmem:[#allocation7 + $0x1c0] sm:$0xff] %v1205
    %1306 = vst [vmem:[#allocation7 + $0x1c8] sm:$0xff] %v1206
    %1307 = vst [vmem:[#allocation7 + $0x1d0] sm:$0xff] %v1207
    %1308 = vst [vmem:[#allocation7 + $0x1d8] sm:$0xff] %v1208
    %1309 = vst [vmem:[#allocation7 + $0x1e0] sm:$0xff] %v1209
    %1310 = vst [vmem:[#allocation7 + $0x1e8] sm:$0xff] %v1210
    %1311 = vst [vmem:[#allocation7 + $0x1f0] sm:$0xff] %v1211
    %1312 = vst [vmem:[#allocation7 + $0x1f8] sm:$0xff] %v1212
    %1313 = vst [vmem:[#allocation7 + $0x200] sm:$0xff] %v1213
    %1314 = vst [vmem:[#allocation7 + $0x208] sm:$0xff] %v1214
    %1315 = vst [vmem:[#allocation7 + $0x210] sm:$0xff] %v1215
    %1316 = vst [vmem:[#allocation7 + $0x218] sm:$0xff] %v1216
    %1317 = vst [vmem:[#allocation7 + $0x220] sm:$0xff] %v1217
    %1318 = vst [vmem:[#allocation7 + $0x228] sm:$0xff] %v1218
    %1319 = vst [vmem:[#allocation7 + $0x230] sm:$0xff] %v1219
    %1320 = vst [vmem:[#allocation7 + $0x238] sm:$0xff] %v1220
    %1321 = vst [vmem:[#allocation7 + $0x240] sm:$0xff] %v1221
    %1322 = vst [vmem:[#allocation7 + $0x248] sm:$0xff] %v1222
    %1323 = vst [vmem:[#allocation7 + $0x250] sm:$0xff] %v1223
    %1324 = vst [vmem:[#allocation7 + $0x258] sm:$0xff] %v1224
    %1325 = vst [vmem:[#allocation7 + $0x260] sm:$0xff] %v1225
    %1326 = vst [vmem:[#allocation7 + $0x268] sm:$0xff] %v1226
    %1327 = vst [vmem:[#allocation7 + $0x270] sm:$0xff] %v1227
    %1328 = vst [vmem:[#allocation7 + $0x278] sm:$0xff] %v1228
    %1329 = vst [vmem:[#allocation7 + $0x280] sm:$0xff] %v1229
    %1330 = vst [vmem:[#allocation7 + $0x288] sm:$0xff] %v1230
    %1331 = vst [vmem:[#allocation7 + $0x290] sm:$0xff] %v1231
    %1332 = vst [vmem:[#allocation7 + $0x298] sm:$0xff] %v1232
    %1333 = vst [vmem:[#allocation7 + $0x2a0] sm:$0xff] %v1233
    %1334 = vst [vmem:[#allocation7 + $0x2a8] sm:$0xff] %v1234
    %1335 = vst [vmem:[#allocation7 + $0x2b0] sm:$0xff] %v1235
    %1336 = vst [vmem:[#allocation7 + $0x2b8] sm:$0xff] %v1236
    %1337 = vst [vmem:[#allocation7 + $0x2c0] sm:$0xff] %v1237
    %1338 = vst [vmem:[#allocation7 + $0x2c8] sm:$0xff] %v1238
    %1339 = vst [vmem:[#allocation7 + $0x2d0] sm:$0xff] %v1239
    %1340 = vst [vmem:[#allocation7 + $0x2d8] sm:$0xff] %v1240
    %1341 = vst [vmem:[#allocation7 + $0x2e0] sm:$0xff] %v1241
    %1342 = vst [vmem:[#allocation7 + $0x2e8] sm:$0xff] %v1242
    %1343 = vst [vmem:[#allocation7 + $0x2f0] sm:$0xff] %v1243
    %1344 = vst [vmem:[#allocation7 + $0x2f8] sm:$0xff] %v1244
    %1345 = vst [vmem:[#allocation7 + $0x300] sm:$0xf] %v1245
    %1346 = vst [vmem:[#allocation7 + $0x308] sm:$0xf] %v1246
    %1347 = vst [vmem:[#allocation7 + $0x310] sm:$0xf] %v1247
    %1348 = vst [vmem:[#allocation7 + $0x318] sm:$0xf] %v1248
    // Predicated region
    $region26: #{tpu_custom_call.1} parent=1 // pred_check
      _
    $region27: #{tpu_custom_call.1} parent=1 // pred_check_branch
      %1350 = sbr.rel (0) target = $region29
    $region28: #{tpu_custom_call.1} parent=1 // pred_region
      %s1352 = ssub.s32 12800, 12800
      %1353 = vsyncadd [#allocation4], %s1352
      %s1354 = sshll.u32 [#allocation7], 4
      %s1355 = int_to_ptr.vmem [resolvable:$true] %s1354
      %1360 = dma.vmem_to_hbm [thread:$0]  %s1355, 12800, %s4, [#allocation4], 512, 512, 32
    $region29: #{tpu_custom_call.1} parent=1 // pred_fallthru
      _
    // Predicated region
    $region30: #{tpu_custom_call.1} parent=1 // pred_check
      _
    $region31: #{tpu_custom_call.1} parent=1 // pred_check_branch
      %1362 = sbr.rel (0) target = $region33
    $region32: #{tpu_custom_call.1} parent=1 // pred_region
      %1363 = dma.done [#allocation4], 12800
    $region33: #{tpu_custom_call.1} parent=1 // pred_fallthru
      _
    %1364 = vsyncpa [#allocation3], 1
    %1365 = vsyncpa [#allocation6], 1
    %1366 = vsyncpa [#allocation4], 1

</llo_original>
